<compile_context>
chip_gen: v7x
topology: tpu7x:2x2x1
jax: 0.10.0
libtpu: 0.0.40
codegen_flags: <defaults>
</compile_context>

<pallas_src>
import math

import jax
import jax.numpy as jnp
from jax.experimental import pallas as pl
from jax.experimental.pallas import tpu as pltpu

# Elements per grid step per input stream (~4 MiB as f32 per stream).
_TARGET_BLOCK_ELEMS = 1 << 20


def _make_kernel(block_rows, lanes, total_rows, ragged):
    """Kernel producing per-block lane-column partial sums.

    Output per grid step i, shape (1, 4, lanes), rows are:
      0: sum over rows of |clamp(pred)-clamp(gt)| * mask
      1: sum over rows of mask
      2: sum over rows of |clamp(pred)-clamp(gt)| * zero_mask
      3: sum over rows of zero_mask
    """

    def kernel(pred_ref, gt_ref, m_ref, z_ref, out_ref):
        pred = jnp.clip(pred_ref[...].astype(jnp.float32), 0.0, 10.0)
        gt = jnp.clip(gt_ref[...].astype(jnp.float32), 0.0, 10.0)
        loss = jnp.abs(pred - gt)
        m = m_ref[...].astype(jnp.float32)
        z = z_ref[...].astype(jnp.float32)

        def emit(loss_, m_, z_):
            lm = jnp.sum(loss_ * m_, axis=0, keepdims=True)
            cm = jnp.sum(m_, axis=0, keepdims=True)
            lz = jnp.sum(loss_ * z_, axis=0, keepdims=True)
            cz = jnp.sum(z_, axis=0, keepdims=True)
            out_ref[...] = jnp.concatenate([lm, cm, lz, cz], axis=0)[None]

        if not ragged:
            emit(loss, m, z)
        else:
            i = pl.program_id(0)
            is_last = i == pl.num_programs(0) - 1

            # Interior blocks: unmasked fast path (no iota/compare/selects).
            @pl.when(jnp.logical_not(is_last))
            def _():
                emit(loss, m, z)

            # Last (partial) block: zero out rows past the logical extent
            # (also kills any NaN garbage read past the array bounds).
            @pl.when(is_last)
            def _():
                n_valid = total_rows - i * block_rows
                row_id = jax.lax.broadcasted_iota(
                    jnp.int32, (block_rows, lanes), 0)
                keep = row_id < n_valid
                emit(jnp.where(keep, loss, 0.0),
                     jnp.where(keep, m, 0.0),
                     jnp.where(keep, z, 0.0))

    return kernel


def masked_l1_loss(pred, gt, mask, zero_mask):
    """Pallas implementation of L1Loss_CustomLoss.forward.

    pred, gt: arrays of identical shape (e.g. NCHW), any float dtype.
    mask, zero_mask: boolean (or 0/1 integer) arrays of the same shape.
    Returns a scalar float32.  (Empty mask -> 0/0 -> NaN, matching
    torch .mean() on an empty selection.)
    """
    assert pred.shape == gt.shape == mask.shape == zero_mask.shape
    n = int(math.prod(pred.shape))

    def byte_mask(x):
        x = x.reshape(-1)
        # Already 1 byte (bool / int8 / uint8): feed directly, no extra HBM
        # pass.  Only down-convert if the incoming mask is wider.
        if x.dtype.itemsize == 1:
            return x
        return x.astype(jnp.int8)

    pred_f = pred.reshape(-1)
    gt_f = gt.reshape(-1)
    m_f = byte_mask(mask)
    z_f = byte_mask(zero_mask)

    # Lane-dense layout: pick a lane width (multiple of 128) that divides the
    # element count so no padding copy is needed; otherwise pad a small tail
    # (padded masks are 0 -> no contribution).
    lanes = None
    for cand in (1024, 512, 256, 128):
        if n % cand == 0:
            lanes = cand
            break
    if lanes is None:
        lanes = 128
        pad = (-n) % lanes
        pred_f = jnp.pad(pred_f, (0, pad))
        gt_f = jnp.pad(gt_f, (0, pad))
        m_f = jnp.pad(m_f, (0, pad))
        z_f = jnp.pad(z_f, (0, pad))
    n_padded = n + ((-n) % lanes)
    rows = n_padded // lanes

    pred2 = pred_f.reshape(rows, lanes)
    gt2 = gt_f.reshape(rows, lanes)
    m2 = m_f.reshape(rows, lanes)
    z2 = z_f.reshape(rows, lanes)

    # Row-block size: ~_TARGET_BLOCK_ELEMS elements per step, multiple of 32
    # (int8/bool pack (32,128) per vreg).  Prefer an exact divisor of `rows`
    # so no block is ragged; cap so the grid keeps >= 2 steps (megacore).
    if rows <= 32:
        block_rows = rows
    else:
        target_rows = max(32, min(rows, _TARGET_BLOCK_ELEMS // lanes) // 32 * 32)
        if rows >= 64:
            half = max(32, (rows // 2) // 32 * 32)
            target_rows = min(target_rows, half)
        block_rows = None
        for b in range(target_rows, 31, -32):
            if rows % b == 0:
                block_rows = b
                break
        if block_rows is None:
            block_rows = target_rows  # ragged last block, gated in-kernel

    g = pl.cdiv(rows, block_rows)
    ragged = (rows % block_rows) != 0

    in_spec = pl.BlockSpec((block_rows, lanes), lambda i: (i, 0))
    out_spec = pl.BlockSpec((1, 4, lanes), lambda i: (i, 0, 0))
    out_sds = jax.ShapeDtypeStruct((g, 4, lanes), jnp.float32)

    kernel = _make_kernel(block_rows, lanes, rows, ragged)

    bytes_accessed = (
        n_padded * (pred2.dtype.itemsize + gt2.dtype.itemsize
                    + m2.dtype.itemsize + z2.dtype.itemsize)
        + g * 4 * lanes * 4
    )
    cost = pl.CostEstimate(
        flops=12 * n_padded, transcendentals=0, bytes_accessed=bytes_accessed
    )

    partials = pl.pallas_call(
        kernel,
        out_shape=out_sds,
        grid_spec=pltpu.PrefetchScalarGridSpec(
            num_scalar_prefetch=0,
            grid=(g,),
            in_specs=[in_spec, in_spec, in_spec, in_spec],
            out_specs=out_spec,
        ),
        compiler_params=pltpu.CompilerParams(
            dimension_semantics=("parallel",),
            vmem_limit_bytes=48 * 1024 * 1024,
        ),
        cost_estimate=cost,
    )(pred2, gt2, m2, z2)

    sums = jnp.sum(partials, axis=(0, 2))  # (lm, cm, lz, cz)
    # Matches torch: mean over an empty mask is NaN (0/0), intentionally.
    return sums[0] / sums[1] + 0.01 * (sums[2] / sums[3])


def _reference(pred, gt, mask, zero_mask):
    pred = jnp.clip(pred.astype(jnp.float32), 0.0, 10.0)
    gt = jnp.clip(gt.astype(jnp.float32), 0.0, 10.0)
    loss = jnp.abs(pred - gt)
    m = mask.astype(jnp.float32)
    z = zero_mask.astype(jnp.float32)
    return jnp.sum(loss * m) / jnp.sum(m) + 0.01 * jnp.sum(loss * z) / jnp.sum(z)


if __name__ == "__main__":
    key = jax.random.PRNGKey(0)

    def run_case(shape, case_key):
        k1, k2, k3, k4 = jax.random.split(case_key, 4)
        pred = jax.random.uniform(k1, shape, jnp.float32, -2.0, 12.0)
        gt = jax.random.uniform(k2, shape, jnp.float32, 0.0, 10.0)
        mask = jax.random.uniform(k3, shape) > 0.3       # valid-depth mask
        zero_mask = jax.random.uniform(k4, shape) > 0.7  # "zero" region mask
        out = jax.block_until_ready(masked_l1_loss(pred, gt, mask, zero_mask))
        ref = _reference(pred, gt, mask, zero_mask)
        assert jnp.allclose(out, ref, rtol=1e-5, atol=1e-6), (shape, out, ref)

    k0, k1 = jax.random.split(key)
    # NCHW, small shapes consistent with a depth-prediction loss.
    run_case((2, 4, 16, 16), k0)   # lane-exact, single-block path
    run_case((2, 3, 37, 53), k1)   # padded tail + multi-block + ragged last block

    print("KERNEL_OK")
</pallas_src>

<mosaic_0001>
module attributes {stable_mosaic.version = 11 : i64} {
  func.func @kernel(%arg0: i32, %arg1: memref<2x1024xf32, #tpu.memory_space<vmem>>, %arg2: memref<2x1024xf32, #tpu.memory_space<vmem>>, %arg3: memref<2x1024xi32, #tpu.memory_space<vmem>>, %arg4: memref<2x1024xi32, #tpu.memory_space<vmem>>, %arg5: memref<1x4x1024xf32, #tpu.memory_space<vmem>>) attributes {dimension_semantics = [#tpu.dimension_semantics<parallel>], iteration_bounds = array<i64: 1>, scalar_prefetch = 0 : i64, scratch_operands = 0 : i64, tpu.core_type = #tpu.core_type<tc>, window_params = [{transform_indices = @transform_0, window_bounds = array<i64: 2, 1024>}, {transform_indices = @transform_1, window_bounds = array<i64: 2, 1024>}, {transform_indices = @transform_2, window_bounds = array<i64: 2, 1024>}, {transform_indices = @transform_3, window_bounds = array<i64: 2, 1024>}, {transform_indices = @transform_4, window_bounds = array<i64: 1, 4, 1024>}]} {
    %c0 = arith.constant 0 : index
    %c0_0 = arith.constant 0 : index
    %0 = vector.load %arg1[%c0, %c0_0] : memref<2x1024xf32, #tpu.memory_space<vmem>>, vector<2x1024xf32>
    %cst = arith.constant 0.000000e+00 : f32
    %cst_1 = arith.constant 1.000000e+01 : f32
    %1 = vector.broadcast %cst : f32 to vector<2x1024xf32>
    %2 = arith.maximumf %1, %0 : vector<2x1024xf32>
    %3 = vector.broadcast %cst_1 : f32 to vector<2x1024xf32>
    %4 = arith.minimumf %3, %2 : vector<2x1024xf32>
    %c0_2 = arith.constant 0 : index
    %c0_3 = arith.constant 0 : index
    %5 = vector.load %arg2[%c0_2, %c0_3] : memref<2x1024xf32, #tpu.memory_space<vmem>>, vector<2x1024xf32>
    %cst_4 = arith.constant 0.000000e+00 : f32
    %cst_5 = arith.constant 1.000000e+01 : f32
    %6 = vector.broadcast %cst_4 : f32 to vector<2x1024xf32>
    %7 = arith.maximumf %6, %5 : vector<2x1024xf32>
    %8 = vector.broadcast %cst_5 : f32 to vector<2x1024xf32>
    %9 = arith.minimumf %8, %7 : vector<2x1024xf32>
    %10 = arith.subf %4, %9 : vector<2x1024xf32>
    %11 = math.absf %10 : vector<2x1024xf32>
    %c0_6 = arith.constant 0 : index
    %c0_7 = arith.constant 0 : index
    %12 = vector.load %arg3[%c0_6, %c0_7] : memref<2x1024xi32, #tpu.memory_space<vmem>>, vector<2x1024xi32>
    %cst_8 = arith.constant dense<0> : vector<2x1024xi32>
    %13 = arith.cmpi ne, %12, %cst_8 : vector<2x1024xi32>
    %14 = arith.extui %13 : vector<2x1024xi1> to vector<2x1024xi32>
    %15 = arith.sitofp %14 : vector<2x1024xi32> to vector<2x1024xf32>
    %c0_9 = arith.constant 0 : index
    %c0_10 = arith.constant 0 : index
    %16 = vector.load %arg4[%c0_9, %c0_10] : memref<2x1024xi32, #tpu.memory_space<vmem>>, vector<2x1024xi32>
    %cst_11 = arith.constant dense<0> : vector<2x1024xi32>
    %17 = arith.cmpi ne, %16, %cst_11 : vector<2x1024xi32>
    %18 = arith.extui %17 : vector<2x1024xi1> to vector<2x1024xi32>
    %19 = arith.sitofp %18 : vector<2x1024xi32> to vector<2x1024xf32>
    %20 = arith.mulf %11, %15 : vector<2x1024xf32>
    %cst_12 = arith.constant dense<0.000000e+00> : vector<1024xf32>
    %21 = vector.multi_reduction <add>, %20, %cst_12 [0] : vector<2x1024xf32> to vector<1024xf32>
    %22 = vector.shape_cast %21 : vector<1024xf32> to vector<1x1024xf32>
    %cst_13 = arith.constant dense<0.000000e+00> : vector<1024xf32>
    %23 = vector.multi_reduction <add>, %15, %cst_13 [0] : vector<2x1024xf32> to vector<1024xf32>
    %24 = vector.shape_cast %23 : vector<1024xf32> to vector<1x1024xf32>
    %25 = arith.mulf %11, %19 : vector<2x1024xf32>
    %cst_14 = arith.constant dense<0.000000e+00> : vector<1024xf32>
    %26 = vector.multi_reduction <add>, %25, %cst_14 [0] : vector<2x1024xf32> to vector<1024xf32>
    %27 = vector.shape_cast %26 : vector<1024xf32> to vector<1x1024xf32>
    %cst_15 = arith.constant dense<0.000000e+00> : vector<1024xf32>
    %28 = vector.multi_reduction <add>, %19, %cst_15 [0] : vector<2x1024xf32> to vector<1024xf32>
    %29 = vector.shape_cast %28 : vector<1024xf32> to vector<1x1024xf32>
    %30 = tpu.concatenate %22, %24, %27, %29 in 0 : vector<1x1024xf32>, vector<1x1024xf32>, vector<1x1024xf32>, vector<1x1024xf32> -> vector<4x1024xf32>
    %31 = vector.shape_cast %30 : vector<4x1024xf32> to vector<1x4x1024xf32>
    %c0_16 = arith.constant 0 : index
    %c0_17 = arith.constant 0 : index
    %c0_18 = arith.constant 0 : index
    %32 = vector.load %arg5[%c0_16, %c0_17, %c0_18] : memref<1x4x1024xf32, #tpu.memory_space<vmem>>, vector<1x4x1024xf32>
    tpu.vector_store %arg5[%c0_16, %c0_17, %c0_18], %31 {strides = array<i32>} : memref<1x4x1024xf32, #tpu.memory_space<vmem>>, vector<1x4x1024xf32>,
    return
  }
  func.func @transform_0(%arg0: i32) -> (i32, i32) {
    %c0_i32 = arith.constant 0 : i32
    %c0_i32_0 = arith.constant 0 : i32
    return %arg0, %c0_i32 : i32, i32
  }
  func.func @transform_1(%arg0: i32) -> (i32, i32) {
    %c0_i32 = arith.constant 0 : i32
    %c0_i32_0 = arith.constant 0 : i32
    return %arg0, %c0_i32 : i32, i32
  }
  func.func @transform_2(%arg0: i32) -> (i32, i32) {
    %c0_i32 = arith.constant 0 : i32
    %c0_i32_0 = arith.constant 0 : i32
    return %arg0, %c0_i32 : i32, i32
  }
  func.func @transform_3(%arg0: i32) -> (i32, i32) {
    %c0_i32 = arith.constant 0 : i32
    %c0_i32_0 = arith.constant 0 : i32
    return %arg0, %c0_i32 : i32, i32
  }
  func.func @transform_4(%arg0: i32) -> (i32, i32, i32) {
    %c0_i32 = arith.constant 0 : i32
    %c0_i32_0 = arith.constant 0 : i32
    %c0_i32_1 = arith.constant 0 : i32
    return %arg0, %c0_i32, %c0_i32_0 : i32, i32, i32
  }
}

</mosaic_0001>

<llo_original>
// kernel: tpu_custom_call.1
$region0: #{tpu_custom_call.1}
  #allocation0 [shape = 'u32[]', space=smem, size = 0x4, offset = 0x4, fixed_abs, tag = 'smem constant byte address 0x4 - core index']
  #allocation1 [shape = 'u32[144,128]{1,0:T(1,128)}', space=vmem, size = 0x12000, scoped, tag = 'internal scratch']
  %s0 = inlined_call_operand.vmem [shape: f32[2,1024], index: 0, kind: input, shape index: {}]
  %s1 = inlined_call_operand.vmem [shape: f32[2,1024], index: 1, kind: input, shape index: {}]
  %s2 = inlined_call_operand.vmem [shape: s32[2,1024], index: 2, kind: input, shape index: {}]
  %s3 = inlined_call_operand.vmem [shape: s32[2,1024], index: 3, kind: input, shape index: {}]
  %s4 = inlined_call_operand.hbm [shape: f32[1,4,1024], index: 4, kind: output, shape index: {}]
  %s5 = sld [smem:[#allocation0]]
  $region26: #{tpu_custom_call.1} parent=0
    _
  %s7 = ssub.s32 1, %s5
  %s8 = scalar_select 0, %s7, %s5
  $region1: #{tpu_custom_call.1} parent=0
    #allocation2 [shape = 'u8[16384]{0}', space=vmem, size = 0x4000, scoped, tag = 'output window, operand 0, single buffered']
    #allocation3 [shape = 's32[1]{0}', space=sflag, size = 0x4, scoped, tag = 'scoped memory for tpu_custom_call.1']
    %9 = vsyncpa [#allocation3], 0
    // Predicated region
    $region2: #{tpu_custom_call.1} parent=1 // pred_check
      _
    $region3: #{tpu_custom_call.1} parent=1 // pred_check_branch
      %11 = sbr.rel (0) target = $region5
    $region4: #{tpu_custom_call.1} parent=1 // pred_region
      _
    $region5: #{tpu_custom_call.1} parent=1 // pred_fallthru
      _
    // Predicated region
    $region6: #{tpu_custom_call.1} parent=1 // pred_check
      _
    $region7: #{tpu_custom_call.1} parent=1 // pred_check_branch
      %13 = sbr.rel (0) target = $region9
    $region8: #{tpu_custom_call.1} parent=1 // pred_region
      _
    $region9: #{tpu_custom_call.1} parent=1 // pred_fallthru
      _
    // Predicated region
    $region10: #{tpu_custom_call.1} parent=1 // pred_check
      _
    $region11: #{tpu_custom_call.1} parent=1 // pred_check_branch
      %15 = sbr.rel (0) target = $region13
    $region12: #{tpu_custom_call.1} parent=1 // pred_region
      _
    $region13: #{tpu_custom_call.1} parent=1 // pred_fallthru
      _
    // Predicated region
    $region14: #{tpu_custom_call.1} parent=1 // pred_check
      _
    $region15: #{tpu_custom_call.1} parent=1 // pred_check_branch
      %17 = sbr.rel (0) target = $region17
    $region16: #{tpu_custom_call.1} parent=1 // pred_region
      _
    $region17: #{tpu_custom_call.1} parent=1 // pred_fallthru
      _
    %v18 = vld [vmem:[%s0] sm:$0xff]
    %v19 = vld [vmem:[%s0 + $0x8] sm:$0xff]
    %v20 = vmax.f32 %v18, 0.0
    %v21 = vmax.f32 %v19, 0.0
    %v22 = vmin.f32 %v20, 10.0
    %v23 = vmin.f32 %v21, 10.0
    %v24 = vld [vmem:[%s1] sm:$0xff]
    %v25 = vld [vmem:[%s1 + $0x8] sm:$0xff]
    %v26 = vmax.f32 %v24, 0.0
    %v27 = vmax.f32 %v25, 0.0
    %v28 = vmin.f32 %v26, 10.0
    %v29 = vmin.f32 %v27, 10.0
    %v30 = vsub.f32 %v22, %v28
    %v31 = vsub.f32 %v23, %v29
    %v32 = vand.u32 2147483647, %v30
    %v33 = vand.u32 2147483647, %v31
    %v34 = vld [vmem:[%s2] sm:$0xff]
    %v35 = vld [vmem:[%s2 + $0x8] sm:$0xff]
    %vm36 = vcmp.ne.s32.totalorder %v34, 0
    %vm37 = vcmp.ne.s32.totalorder %v35, 0
    %v38 = vsel %vm36, 1, 0
    %v39 = vsel %vm37, 1, 0
    %v40 = vcvt.s32.f32 %v38
    %v41 = vcvt.s32.f32 %v39
    %v42 = vld [vmem:[%s3] sm:$0xff]
    %v43 = vld [vmem:[%s3 + $0x8] sm:$0xff]
    %vm44 = vcmp.ne.s32.totalorder %v42, 0
    %vm45 = vcmp.ne.s32.totalorder %v43, 0
    %v46 = vsel %vm44, 1, 0
    %v47 = vsel %vm45, 1, 0
    %v48 = vcvt.s32.f32 %v46
    %v49 = vcvt.s32.f32 %v47
    %v50 = vmul.f32 %v32, %v40
    %v51 = vmul.f32 %v33, %v41
    %v54 = vcombine.high %v50, %v50
    %v56 = vunpack.c.l.s4 1983009808
    %v57 = vunpack.c.0.s8 %v56
    %v58 = vlaneseq
    %v59 = vshrl.u32 %v58, 7
    %v60 = vsub.s32 %v57, %v59
    %v61 = vrot.slane %v50, %v60
    %v63 = vunpack.c.l.s4 1983009808
    %v64 = vunpack.c.0.s8 %v63
    %v65 = vlaneseq
    %v66 = vshrl.u32 %v65, 7
    %v67 = vsub.s32 %v64, %v66
    %v68 = vrot.slane %v54, %v67
    %v69 = vcombine.high %v61, %v61
    %v70 = vcombine.high %v68, %v68
    %v71 = vcombine.high %v51, %v51
    %v73 = vunpack.c.l.s4 1983009808
    %v74 = vunpack.c.0.s8 %v73
    %v75 = vlaneseq
    %v76 = vshrl.u32 %v75, 7
    %v77 = vsub.s32 %v74, %v76
    %v78 = vrot.slane %v51, %v77
    %v80 = vunpack.c.l.s4 1983009808
    %v81 = vunpack.c.0.s8 %v80
    %v82 = vlaneseq
    %v83 = vshrl.u32 %v82, 7
    %v84 = vsub.s32 %v81, %v83
    %v85 = vrot.slane %v71, %v84
    %v86 = vcombine.high %v78, %v78
    %v87 = vcombine.high %v85, %v85
    %vm96 = vcmask 1041408
    %v97 = vsel %vm96, %v61, 0.0
    %v98 = vrot.slane %v97, 4
    %v99 = vadd.f32 %v97, %v98
    %v100 = vrot.slane %v99, 2
    %v101 = vadd.f32 %v99, %v100
    %v102 = vrot.slane %v101, 1
    %v103 = vadd.f32 %v101, %v102
    %v104 = vsel %vm96, %v69, 0.0
    %v105 = vrot.slane %v104, 4
    %v106 = vadd.f32 %v104, %v105
    %v107 = vrot.slane %v106, 2
    %v108 = vadd.f32 %v106, %v107
    %v109 = vrot.slane %v108, 1
    %v110 = vadd.f32 %v108, %v109
    %v111 = vsel %vm96, %v68, 0.0
    %v112 = vrot.slane %v111, 4
    %v113 = vadd.f32 %v111, %v112
    %v114 = vrot.slane %v113, 2
    %v115 = vadd.f32 %v113, %v114
    %v116 = vrot.slane %v115, 1
    %v117 = vadd.f32 %v115, %v116
    %v118 = vsel %vm96, %v70, 0.0
    %v119 = vrot.slane %v118, 4
    %v120 = vadd.f32 %v118, %v119
    %v121 = vrot.slane %v120, 2
    %v122 = vadd.f32 %v120, %v121
    %v123 = vrot.slane %v122, 1
    %v124 = vadd.f32 %v122, %v123
    %v125 = vsel %vm96, %v78, 0.0
    %v126 = vrot.slane %v125, 4
    %v127 = vadd.f32 %v125, %v126
    %v128 = vrot.slane %v127, 2
    %v129 = vadd.f32 %v127, %v128
    %v130 = vrot.slane %v129, 1
    %v131 = vadd.f32 %v129, %v130
    %v132 = vsel %vm96, %v86, 0.0
    %v133 = vrot.slane %v132, 4
    %v134 = vadd.f32 %v132, %v133
    %v135 = vrot.slane %v134, 2
    %v136 = vadd.f32 %v134, %v135
    %v137 = vrot.slane %v136, 1
    %v138 = vadd.f32 %v136, %v137
    %v139 = vsel %vm96, %v85, 0.0
    %v140 = vrot.slane %v139, 4
    %v141 = vadd.f32 %v139, %v140
    %v142 = vrot.slane %v141, 2
    %v143 = vadd.f32 %v141, %v142
    %v144 = vrot.slane %v143, 1
    %v145 = vadd.f32 %v143, %v144
    %v146 = vsel %vm96, %v87, 0.0
    %v147 = vrot.slane %v146, 4
    %v148 = vadd.f32 %v146, %v147
    %v149 = vrot.slane %v148, 2
    %v150 = vadd.f32 %v148, %v149
    %v151 = vrot.slane %v150, 1
    %v152 = vadd.f32 %v150, %v151
    %v155 = vcombine.high %v40, %v40
    %v157 = vunpack.c.l.s4 1983009808
    %v158 = vunpack.c.0.s8 %v157
    %v159 = vlaneseq
    %v160 = vshrl.u32 %v159, 7
    %v161 = vsub.s32 %v158, %v160
    %v162 = vrot.slane %v40, %v161
    %v164 = vunpack.c.l.s4 1983009808
    %v165 = vunpack.c.0.s8 %v164
    %v166 = vlaneseq
    %v167 = vshrl.u32 %v166, 7
    %v168 = vsub.s32 %v165, %v167
    %v169 = vrot.slane %v155, %v168
    %v170 = vcombine.high %v162, %v162
    %v171 = vcombine.high %v169, %v169
    %v172 = vcombine.high %v41, %v41
    %v174 = vunpack.c.l.s4 1983009808
    %v175 = vunpack.c.0.s8 %v174
    %v176 = vlaneseq
    %v177 = vshrl.u32 %v176, 7
    %v178 = vsub.s32 %v175, %v177
    %v179 = vrot.slane %v41, %v178
    %v181 = vunpack.c.l.s4 1983009808
    %v182 = vunpack.c.0.s8 %v181
    %v183 = vlaneseq
    %v184 = vshrl.u32 %v183, 7
    %v185 = vsub.s32 %v182, %v184
    %v186 = vrot.slane %v172, %v185
    %v187 = vcombine.high %v179, %v179
    %v188 = vcombine.high %v186, %v186
    %v197 = vsel %vm96, %v162, 0.0
    %v198 = vrot.slane %v197, 4
    %v199 = vadd.f32 %v197, %v198
    %v200 = vrot.slane %v199, 2
    %v201 = vadd.f32 %v199, %v200
    %v202 = vrot.slane %v201, 1
    %v203 = vadd.f32 %v201, %v202
    %v204 = vsel %vm96, %v170, 0.0
    %v205 = vrot.slane %v204, 4
    %v206 = vadd.f32 %v204, %v205
    %v207 = vrot.slane %v206, 2
    %v208 = vadd.f32 %v206, %v207
    %v209 = vrot.slane %v208, 1
    %v210 = vadd.f32 %v208, %v209
    %v211 = vsel %vm96, %v169, 0.0
    %v212 = vrot.slane %v211, 4
    %v213 = vadd.f32 %v211, %v212
    %v214 = vrot.slane %v213, 2
    %v215 = vadd.f32 %v213, %v214
    %v216 = vrot.slane %v215, 1
    %v217 = vadd.f32 %v215, %v216
    %v218 = vsel %vm96, %v171, 0.0
    %v219 = vrot.slane %v218, 4
    %v220 = vadd.f32 %v218, %v219
    %v221 = vrot.slane %v220, 2
    %v222 = vadd.f32 %v220, %v221
    %v223 = vrot.slane %v222, 1
    %v224 = vadd.f32 %v222, %v223
    %v225 = vsel %vm96, %v179, 0.0
    %v226 = vrot.slane %v225, 4
    %v227 = vadd.f32 %v225, %v226
    %v228 = vrot.slane %v227, 2
    %v229 = vadd.f32 %v227, %v228
    %v230 = vrot.slane %v229, 1
    %v231 = vadd.f32 %v229, %v230
    %v232 = vsel %vm96, %v187, 0.0
    %v233 = vrot.slane %v232, 4
    %v234 = vadd.f32 %v232, %v233
    %v235 = vrot.slane %v234, 2
    %v236 = vadd.f32 %v234, %v235
    %v237 = vrot.slane %v236, 1
    %v238 = vadd.f32 %v236, %v237
    %v239 = vsel %vm96, %v186, 0.0
    %v240 = vrot.slane %v239, 4
    %v241 = vadd.f32 %v239, %v240
    %v242 = vrot.slane %v241, 2
    %v243 = vadd.f32 %v241, %v242
    %v244 = vrot.slane %v243, 1
    %v245 = vadd.f32 %v243, %v244
    %v246 = vsel %vm96, %v188, 0.0
    %v247 = vrot.slane %v246, 4
    %v248 = vadd.f32 %v246, %v247
    %v249 = vrot.slane %v248, 2
    %v250 = vadd.f32 %v248, %v249
    %v251 = vrot.slane %v250, 1
    %v252 = vadd.f32 %v250, %v251
    %v253 = vmul.f32 %v32, %v48
    %v254 = vmul.f32 %v33, %v49
    %v257 = vcombine.high %v253, %v253
    %v259 = vunpack.c.l.s4 1983009808
    %v260 = vunpack.c.0.s8 %v259
    %v261 = vlaneseq
    %v262 = vshrl.u32 %v261, 7
    %v263 = vsub.s32 %v260, %v262
    %v264 = vrot.slane %v253, %v263
    %v266 = vunpack.c.l.s4 1983009808
    %v267 = vunpack.c.0.s8 %v266
    %v268 = vlaneseq
    %v269 = vshrl.u32 %v268, 7
    %v270 = vsub.s32 %v267, %v269
    %v271 = vrot.slane %v257, %v270
    %v272 = vcombine.high %v264, %v264
    %v273 = vcombine.high %v271, %v271
    %v274 = vcombine.high %v254, %v254
    %v276 = vunpack.c.l.s4 1983009808
    %v277 = vunpack.c.0.s8 %v276
    %v278 = vlaneseq
    %v279 = vshrl.u32 %v278, 7
    %v280 = vsub.s32 %v277, %v279
    %v281 = vrot.slane %v254, %v280
    %v283 = vunpack.c.l.s4 1983009808
    %v284 = vunpack.c.0.s8 %v283
    %v285 = vlaneseq
    %v286 = vshrl.u32 %v285, 7
    %v287 = vsub.s32 %v284, %v286
    %v288 = vrot.slane %v274, %v287
    %v289 = vcombine.high %v281, %v281
    %v290 = vcombine.high %v288, %v288
    %v299 = vsel %vm96, %v264, 0.0
    %v300 = vrot.slane %v299, 4
    %v301 = vadd.f32 %v299, %v300
    %v302 = vrot.slane %v301, 2
    %v303 = vadd.f32 %v301, %v302
    %v304 = vrot.slane %v303, 1
    %v305 = vadd.f32 %v303, %v304
    %v306 = vsel %vm96, %v272, 0.0
    %v307 = vrot.slane %v306, 4
    %v308 = vadd.f32 %v306, %v307
    %v309 = vrot.slane %v308, 2
    %v310 = vadd.f32 %v308, %v309
    %v311 = vrot.slane %v310, 1
    %v312 = vadd.f32 %v310, %v311
    %v313 = vsel %vm96, %v271, 0.0
    %v314 = vrot.slane %v313, 4
    %v315 = vadd.f32 %v313, %v314
    %v316 = vrot.slane %v315, 2
    %v317 = vadd.f32 %v315, %v316
    %v318 = vrot.slane %v317, 1
    %v319 = vadd.f32 %v317, %v318
    %v320 = vsel %vm96, %v273, 0.0
    %v321 = vrot.slane %v320, 4
    %v322 = vadd.f32 %v320, %v321
    %v323 = vrot.slane %v322, 2
    %v324 = vadd.f32 %v322, %v323
    %v325 = vrot.slane %v324, 1
    %v326 = vadd.f32 %v324, %v325
    %v327 = vsel %vm96, %v281, 0.0
    %v328 = vrot.slane %v327, 4
    %v329 = vadd.f32 %v327, %v328
    %v330 = vrot.slane %v329, 2
    %v331 = vadd.f32 %v329, %v330
    %v332 = vrot.slane %v331, 1
    %v333 = vadd.f32 %v331, %v332
    %v334 = vsel %vm96, %v289, 0.0
    %v335 = vrot.slane %v334, 4
    %v336 = vadd.f32 %v334, %v335
    %v337 = vrot.slane %v336, 2
    %v338 = vadd.f32 %v336, %v337
    %v339 = vrot.slane %v338, 1
    %v340 = vadd.f32 %v338, %v339
    %v341 = vsel %vm96, %v288, 0.0
    %v342 = vrot.slane %v341, 4
    %v343 = vadd.f32 %v341, %v342
    %v344 = vrot.slane %v343, 2
    %v345 = vadd.f32 %v343, %v344
    %v346 = vrot.slane %v345, 1
    %v347 = vadd.f32 %v345, %v346
    %v348 = vsel %vm96, %v290, 0.0
    %v349 = vrot.slane %v348, 4
    %v350 = vadd.f32 %v348, %v349
    %v351 = vrot.slane %v350, 2
    %v352 = vadd.f32 %v350, %v351
    %v353 = vrot.slane %v352, 1
    %v354 = vadd.f32 %v352, %v353
    %v357 = vcombine.high %v48, %v48
    %v359 = vunpack.c.l.s4 1983009808
    %v360 = vunpack.c.0.s8 %v359
    %v361 = vlaneseq
    %v362 = vshrl.u32 %v361, 7
    %v363 = vsub.s32 %v360, %v362
    %v364 = vrot.slane %v48, %v363
    %v366 = vunpack.c.l.s4 1983009808
    %v367 = vunpack.c.0.s8 %v366
    %v368 = vlaneseq
    %v369 = vshrl.u32 %v368, 7
    %v370 = vsub.s32 %v367, %v369
    %v371 = vrot.slane %v357, %v370
    %v372 = vcombine.high %v364, %v364
    %v373 = vcombine.high %v371, %v371
    %v374 = vcombine.high %v49, %v49
    %v376 = vunpack.c.l.s4 1983009808
    %v377 = vunpack.c.0.s8 %v376
    %v378 = vlaneseq
    %v379 = vshrl.u32 %v378, 7
    %v380 = vsub.s32 %v377, %v379
    %v381 = vrot.slane %v49, %v380
    %v383 = vunpack.c.l.s4 1983009808
    %v384 = vunpack.c.0.s8 %v383
    %v385 = vlaneseq
    %v386 = vshrl.u32 %v385, 7
    %v387 = vsub.s32 %v384, %v386
    %v388 = vrot.slane %v374, %v387
    %v389 = vcombine.high %v381, %v381
    %v390 = vcombine.high %v388, %v388
    %v399 = vsel %vm96, %v364, 0.0
    %v400 = vrot.slane %v399, 4
    %v401 = vadd.f32 %v399, %v400
    %v402 = vrot.slane %v401, 2
    %v403 = vadd.f32 %v401, %v402
    %v404 = vrot.slane %v403, 1
    %v405 = vadd.f32 %v403, %v404
    %v406 = vsel %vm96, %v372, 0.0
    %v407 = vrot.slane %v406, 4
    %v408 = vadd.f32 %v406, %v407
    %v409 = vrot.slane %v408, 2
    %v410 = vadd.f32 %v408, %v409
    %v411 = vrot.slane %v410, 1
    %v412 = vadd.f32 %v410, %v411
    %v413 = vsel %vm96, %v371, 0.0
    %v414 = vrot.slane %v413, 4
    %v415 = vadd.f32 %v413, %v414
    %v416 = vrot.slane %v415, 2
    %v417 = vadd.f32 %v415, %v416
    %v418 = vrot.slane %v417, 1
    %v419 = vadd.f32 %v417, %v418
    %v420 = vsel %vm96, %v373, 0.0
    %v421 = vrot.slane %v420, 4
    %v422 = vadd.f32 %v420, %v421
    %v423 = vrot.slane %v422, 2
    %v424 = vadd.f32 %v422, %v423
    %v425 = vrot.slane %v424, 1
    %v426 = vadd.f32 %v424, %v425
    %v427 = vsel %vm96, %v381, 0.0
    %v428 = vrot.slane %v427, 4
    %v429 = vadd.f32 %v427, %v428
    %v430 = vrot.slane %v429, 2
    %v431 = vadd.f32 %v429, %v430
    %v432 = vrot.slane %v431, 1
    %v433 = vadd.f32 %v431, %v432
    %v434 = vsel %vm96, %v389, 0.0
    %v435 = vrot.slane %v434, 4
    %v436 = vadd.f32 %v434, %v435
    %v437 = vrot.slane %v436, 2
    %v438 = vadd.f32 %v436, %v437
    %v439 = vrot.slane %v438, 1
    %v440 = vadd.f32 %v438, %v439
    %v441 = vsel %vm96, %v388, 0.0
    %v442 = vrot.slane %v441, 4
    %v443 = vadd.f32 %v441, %v442
    %v444 = vrot.slane %v443, 2
    %v445 = vadd.f32 %v443, %v444
    %v446 = vrot.slane %v445, 1
    %v447 = vadd.f32 %v445, %v446
    %v448 = vsel %vm96, %v390, 0.0
    %v449 = vrot.slane %v448, 4
    %v450 = vadd.f32 %v448, %v449
    %v451 = vrot.slane %v450, 2
    %v452 = vadd.f32 %v450, %v451
    %v453 = vrot.slane %v452, 1
    %v454 = vadd.f32 %v452, %v453
    %vm455 = vcmask 1040384
    %v456 = vsel %vm455, %v103, %v203
    %v457 = vsel %vm455, %v110, %v210
    %v458 = vsel %vm455, %v117, %v217
    %v459 = vsel %vm455, %v124, %v224
    %v460 = vsel %vm455, %v131, %v231
    %v461 = vsel %vm455, %v138, %v238
    %v462 = vsel %vm455, %v145, %v245
    %v463 = vsel %vm455, %v152, %v252
    %v464 = vsel %vm96, %v456, %v305
    %v465 = vsel %vm96, %v457, %v312
    %v466 = vsel %vm96, %v458, %v319
    %v467 = vsel %vm96, %v459, %v326
    %v468 = vsel %vm96, %v460, %v333
    %v469 = vsel %vm96, %v461, %v340
    %v470 = vsel %vm96, %v462, %v347
    %v471 = vsel %vm96, %v463, %v354
    %vm472 = vcmask 1042432
    %v473 = vsel %vm472, %v464, %v405
    %v474 = vsel %vm472, %v465, %v412
    %v475 = vsel %vm472, %v466, %v419
    %v476 = vsel %vm472, %v467, %v426
    %v477 = vsel %vm472, %v468, %v433
    %v478 = vsel %vm472, %v469, %v440
    %v479 = vsel %vm472, %v470, %v447
    %v480 = vsel %vm472, %v471, %v454
    %v489 = vcombine.low %v473, %v474
    %v490 = vcombine.low %v475, %v476
    %v491 = vcombine.low %v477, %v478
    %v492 = vcombine.low %v479, %v480
    %497 = vst [vmem:[#allocation2] sm:$0xff] %v489
    %498 = vst [vmem:[#allocation2 + $0x8] sm:$0xff] %v490
    %499 = vst [vmem:[#allocation2 + $0x10] sm:$0xff] %v491
    %500 = vst [vmem:[#allocation2 + $0x18] sm:$0xff] %v492
    // Predicated region
    $region18: #{tpu_custom_call.1} parent=1 // pred_check
      _
    $region19: #{tpu_custom_call.1} parent=1 // pred_check_branch
      %502 = sbr.rel (0) target = $region21
    $region20: #{tpu_custom_call.1} parent=1 // pred_region
      %s504 = ssub.s32 512, 512
      %505 = vsyncadd [#allocation3], %s504
      %s507 = sshll.u32 [#allocation2], 4
      %s508 = int_to_ptr.vmem [resolvable:$true] %s507
      %510 = dma.vmem_to_hbm [thread:$0]  %s508, 512, %s4, [#allocation3]
    $region21: #{tpu_custom_call.1} parent=1 // pred_fallthru
      _
    // Predicated region
    $region22: #{tpu_custom_call.1} parent=1 // pred_check
      _
    $region23: #{tpu_custom_call.1} parent=1 // pred_check_branch
      %512 = sbr.rel (0) target = $region25
    $region24: #{tpu_custom_call.1} parent=1 // pred_region
      %513 = dma.done [#allocation3], 512
    $region25: #{tpu_custom_call.1} parent=1 // pred_fallthru
      _
    %514 = vsyncpa [#allocation3], 1

</llo_original>
